<compile_context>
chip_gen: v7x
topology: tpu7x:2x2x1
jax: 0.10.0
libtpu: 0.0.40
codegen_flags: <defaults>
</compile_context>

<pallas_src>
import math

import jax
import jax.numpy as jnp
from jax import lax
from jax.experimental import pallas as pl
from jax.experimental.pallas import tpu as pltpu

PI = math.pi

MAX_TILE_I = 65536   # max interactions per grid step per core (tile_l = 8192 lanes)


def _round_up(x, m):
    return ((x + m - 1) // m) * m


def _num_tensorcores():
    # 2 TensorCores per chip only on v7x; v5e/v6e have 1 (a 2-way split there is pure overhead).
    try:
        kind = jax.devices()[0].device_kind.lower()
        if "v7" in kind:
            return 2
    except Exception:
        pass
    return 1


def _is_v5e():
    try:
        kind = jax.devices()[0].device_kind.lower()
        return ("v5e" in kind) or ("v5 lite" in kind) or ("v5lite" in kind)
    except Exception:
        return False


def _recip(x):
    # EUP approximate reciprocal + one Newton-Raphson step -> ~full f32 accuracy,
    # while keeping the divide off the saturated VALU slot.
    r = pl.reciprocal(x, approx=True)
    return r * (jnp.float32(2.0) - x * r)


def _atan_core(x):
    """Cephes-style float32 atan; divides via EUP approx reciprocal + Newton step."""
    sign = jnp.where(x < 0.0, jnp.float32(-1.0), jnp.float32(1.0))
    ax = jnp.abs(x)
    t3p8 = jnp.float32(2.414213562373095)    # tan(3*pi/8)
    tp8 = jnp.float32(0.4142135623730951)    # tan(pi/8)
    big = ax > t3p8
    mid = jnp.logical_and(ax > tp8, jnp.logical_not(big))
    numer = jnp.where(big, jnp.float32(-1.0), jnp.where(mid, ax - 1.0, ax))
    denom = jnp.where(big, ax, jnp.where(mid, ax + 1.0, jnp.float32(1.0)))
    xr = numer * _recip(denom)
    y0 = jnp.where(big, jnp.float32(PI / 2),
                   jnp.where(mid, jnp.float32(PI / 4), jnp.float32(0.0)))
    z = xr * xr
    p = (((jnp.float32(8.05374449538e-2) * z - jnp.float32(1.38776856032e-1)) * z
          + jnp.float32(1.99777106478e-1)) * z - jnp.float32(3.33329491539e-1)) * z * xr + xr
    return sign * (y0 + p)


def _atan2(y, x):
    safe_x = jnp.where(x == 0.0, jnp.float32(1.0), x)
    base = _atan_core(y * _recip(safe_x))
    pi_f = jnp.float32(PI)
    half_pi = jnp.float32(PI / 2)
    neg = jnp.where(y >= 0.0, base + pi_f, base - pi_f)
    zero_x = jnp.where(y > 0.0, half_pi, jnp.where(y < 0.0, -half_pi, jnp.float32(0.0)))
    return jnp.where(x > 0.0, base, jnp.where(x < 0.0, neg, zero_x))


def _shifted_improper_kernel(smin_ref, smax_ref, data_ref, batch_ref, out_ref, acc_ref):
    # smin/smax : (n_tiles,) int32 SMEM (scalar prefetch) -- per-tile structure-id range
    # data      : (112, TILE_L) f32 -- 14 fields x 8 sublanes each (field f at rows 8f..8f+7):
    #               fields 0..3 = x of atoms 0..3, 4..7 = y, 8..11 = z, 12 = x0, 13 = k
    # batch     : (8, TILE_L) int32 structure id per interaction (-1 on padding)
    # out       : (S_PAD, 128) f32 lane-partial per-structure energies (core axis squeezed)
    # acc       : (S_PAD, 8, 128) f32 scratch accumulator (tile-size independent)
    c = pl.program_id(0)
    j = pl.program_id(1)
    nj = pl.num_programs(1)
    tile = c * nj + j
    tile_l = batch_ref.shape[1]

    @pl.when(j == 0)
    def _init():
        acc_ref[...] = jnp.zeros_like(acc_ref)

    def fld(i):
        return data_ref[i * 8:(i + 1) * 8, :]

    p0x, p1x, p2x, p3x = fld(0), fld(1), fld(2), fld(3)
    p0y, p1y, p2y, p3y = fld(4), fld(5), fld(6), fld(7)
    p0z, p1z, p2z, p3z = fld(8), fld(9), fld(10), fld(11)
    x0 = fld(12)
    kk = fld(13)

    # bond vectors
    b1x, b1y, b1z = p1x - p0x, p1y - p0y, p1z - p0z
    b2x, b2y, b2z = p2x - p1x, p2y - p1y, p2z - p1z
    b3x, b3y, b3z = p3x - p2x, p3y - p2y, p3z - p2z

    # n1 = b1 x b2 ; n2 = b2 x b3
    n1x = b1y * b2z - b1z * b2y
    n1y = b1z * b2x - b1x * b2z
    n1z = b1x * b2y - b1y * b2x
    n2x = b2y * b3z - b2z * b3y
    n2y = b2z * b3x - b2x * b3z
    n2z = b2x * b3y - b2y * b3x

    b2n = jnp.sqrt(b2x * b2x + b2y * b2y + b2z * b2z)
    # m1.n2 == -|b2|*(b1.n2); shifted-periodic transform folded into the angle:
    #   theta_shifted = atan2(-m1.n2, -n1.n2) = atan2(|b2|*(b1.n2), -(n1.n2))
    y_s = b2n * (b1x * n2x + b1y * n2y + b1z * n2z)
    x_s = -(n1x * n2x + n1y * n2y + n1z * n2z)
    theta = _atan2(y_s, x_s)                     # already in the shifted frame (-pi, pi]

    d = theta - x0
    e = kk * d * d                               # (8, TILE_L); V0 == 0, k == 0 on padding

    # scatter-sum onto structures, bounded to the structures present in this tile:
    # mask -> tree-add the lane-aligned 128-wide static slices -> one small RMW on acc.
    seg = batch_ref[...]                         # (8, TILE_L) int32, -1 on padding
    s_lo = smin_ref[tile]
    s_hi = smax_ref[tile]

    def scatter_one(s, carry):
        masked = jnp.where(seg == s, e, jnp.float32(0.0))
        part = masked[:, 0:128]
        for cstart in range(128, tile_l, 128):
            part = part + masked[:, cstart:cstart + 128]
        acc_ref[s] = acc_ref[s] + part           # (8, 128) read-modify-write
        return carry

    lax.fori_loop(s_lo, s_hi + 1, scatter_one, 0)

    @pl.when(j == nj - 1)
    def _finish():
        # fused sublane reduction; lane-dense (S_PAD, 128) store, final tiny lane/core
        # sum happens in the wrapper.
        out_ref[...] = jnp.sum(acc_ref[...], axis=1)


def shifted_periodic_harmonic_impropers(pos, mapping, mapping_batch, atom_types,
                                        x0_table, k_table, n_structures):
    """Returns per-structure energies, shape (n_structures,), float32."""
    assert mapping.shape[0] == 4
    m = int(mapping.shape[1])
    n_structures = int(n_structures)
    ncores = _num_tensorcores()

    # ---- glue (plain JAX): single gathers, minimal HBM materializations ----
    t = atom_types[mapping]                                  # (4, M)
    n_types = x0_table.shape[0]
    flat_t = ((t[0] * n_types + t[1]) * n_types + t[2]) * n_types + t[3]
    x0 = x0_table.reshape(-1)[flat_t].astype(jnp.float32)    # (M,)
    kk = k_table.reshape(-1)[flat_t].astype(jnp.float32)     # (M,)

    # gather coord-major from pos.T so the M axis stays last -> no M-sized transpose pass
    coords = pos.T.astype(jnp.float32)[:, mapping].reshape(12, m)   # rows: x0..x3,y0..y3,z0..z3

    fields = jnp.concatenate([coords, x0[None, :], kk[None, :]], axis=0)   # (14, M)

    # tiling / padding: interactions packed as (8 sublanes, lanes) slabs
    tile_i = min(MAX_TILE_I, _round_up(max(1, -(-m // ncores)), 1024))
    n_pad = _round_up(m, ncores * tile_i)
    lanes = n_pad // 8
    tile_l = tile_i // 8
    nb_per_core = n_pad // (ncores * tile_i)
    n_tiles = ncores * nb_per_core
    pad = n_pad - m

    fields = jnp.pad(fields, ((0, 0), (0, pad)))             # padded k == 0 -> zero energy
    data = fields.reshape(14 * 8, lanes)                      # (112, lanes), contiguous

    batch_flat = jnp.pad(mapping_batch.astype(jnp.int32), (0, pad), constant_values=-1)
    batch = batch_flat.reshape(8, lanes)                      # -1 never matches a structure

    # per-tile structure-id bounds (scalar prefetched) -> scatter cost O(structs per tile)
    bt = batch.reshape(8, n_tiles, tile_l)
    smax = jnp.max(bt, axis=(0, 2)).astype(jnp.int32)
    smin = jnp.min(jnp.where(bt < 0, jnp.int32(n_structures), bt), axis=(0, 2)).astype(jnp.int32)
    smin = jnp.where(smax < 0, jnp.int32(0), smin)            # all-padding tile -> empty range

    s_pad = max(8, _round_up(n_structures, 8))

    data_idx = lambda c, j, smin_r, smax_r: (0, c * nb_per_core + j)
    data_spec = pl.BlockSpec((14 * 8, tile_l), data_idx)
    if _is_v5e():
        # v5e: slower HBM -> 3-deep input pipeline hides exposed DMA across step boundaries
        try:
            data_spec = pl.BlockSpec((14 * 8, tile_l), data_idx,
                                     pipeline_mode=pl.Buffered(3))
        except TypeError:
            pass

    # explicit scoped-VMEM budget (triple-buffer worst case + acc + out), capped for v7x headroom
    vmem_bytes = (3 * (112 * tile_l * 4 + 8 * tile_l * 4)
                  + s_pad * 8 * 128 * 4 + 2 * s_pad * 128 * 4 + (4 << 20))
    vmem_limit = int(min(max(vmem_bytes, 16 << 20), 56 << 20))

    out = pl.pallas_call(
        _shifted_improper_kernel,
        out_shape=jax.ShapeDtypeStruct((ncores, s_pad, 128), jnp.float32),
        grid_spec=pltpu.PrefetchScalarGridSpec(
            num_scalar_prefetch=2,
            grid=(ncores, nb_per_core),
            in_specs=[
                data_spec,
                pl.BlockSpec((8, tile_l),
                             lambda c, j, smin_r, smax_r: (0, c * nb_per_core + j)),
            ],
            out_specs=pl.BlockSpec((None, s_pad, 128),
                                   lambda c, j, smin_r, smax_r: (c, 0, 0)),
            scratch_shapes=[pltpu.VMEM((s_pad, 8, 128), jnp.float32)],
        ),
        compiler_params=pltpu.CompilerParams(
            dimension_semantics=("parallel", "arbitrary"),
            vmem_limit_bytes=vmem_limit),
    )(smin, smax, data, batch)

    # tiny final reduction: sum per-core, per-lane partials; drop structure padding
    return jnp.sum(out, axis=(0, 2))[:n_structures]


def _reference(pos, mapping, mapping_batch, atom_types, x0_table, k_table, n_structures):
    p = pos[mapping]                                  # (4, M, 3)
    b1 = p[1] - p[0]
    b2 = p[2] - p[1]
    b3 = p[3] - p[2]
    n1 = jnp.cross(b1, b2)
    n2 = jnp.cross(b2, b3)
    m1 = jnp.cross(n1, b2 / jnp.linalg.norm(b2, axis=1, keepdims=True))
    x = jnp.sum(n1 * n2, axis=1)
    y = jnp.sum(m1 * n2, axis=1)
    theta = jnp.arctan2(y, x)
    theta = jnp.where(theta < 0, theta + 2 * PI, theta) - PI
    t = atom_types[mapping]
    x0 = x0_table[t[0], t[1], t[2], t[3]]
    k = k_table[t[0], t[1], t[2], t[3]]
    e = k * (theta - x0) ** 2
    return jax.ops.segment_sum(e, mapping_batch, num_segments=n_structures)


if __name__ == "__main__":
    key = jax.random.PRNGKey(0)
    k_pos, k_types, k_x0, k_k = jax.random.split(key, 4)

    n_atoms = 16
    n_mapping = 8
    n_structures = 2
    n_types = 4  # module __init__: buffers of shape (max_type+1,)*order, order=4

    pos = jax.random.normal(k_pos, (n_atoms, 3), dtype=jnp.float32) * 2.0
    atom_types = jax.random.randint(k_types, (n_atoms,), 0, n_types)

    # improper quadruples (i, i+1, i+2, i+3) for i = 0..7  -> mapping (4, 8)
    base = jnp.arange(n_mapping, dtype=jnp.int32)
    mapping = jnp.stack([base, base + 1, base + 2, base + 3], axis=0)
    mapping_batch = jnp.array([0, 0, 0, 0, 1, 1, 1, 1], dtype=jnp.int32)

    # deterministic "fitted" prior tables (synthetic, not a checkpoint load)
    x0_table = jax.random.uniform(k_x0, (n_types,) * 4, dtype=jnp.float32,
                                  minval=-PI / 2, maxval=PI / 2)
    k_table = jax.random.uniform(k_k, (n_types,) * 4, dtype=jnp.float32,
                                 minval=1.0, maxval=5.0)

    energy = shifted_periodic_harmonic_impropers(
        pos, mapping, mapping_batch, atom_types, x0_table, k_table, n_structures)
    energy = jax.block_until_ready(energy)

    ref = _reference(pos, mapping, mapping_batch, atom_types, x0_table, k_table, n_structures)
    assert energy.shape == (n_structures,)
    # tolerance tightened vs previous revision: reciprocals now get one Newton step
    assert jnp.allclose(energy, ref, rtol=1e-3, atol=5e-3), (energy, ref)

    print("KERNEL_OK")
</pallas_src>

<mosaic_0001>
module attributes {stable_mosaic.version = 11 : i64} {
  func.func @_shifted_improper_kernel(%arg0: i32, %arg1: i32, %arg2: memref<1xi32, #tpu.memory_space<smem>>, %arg3: memref<1xi32, #tpu.memory_space<smem>>, %arg4: memref<112x128xf32, #tpu.memory_space<vmem>>, %arg5: memref<8x128xi32, #tpu.memory_space<vmem>>, %arg6: memref<1x8x128xf32, #tpu.memory_space<vmem>>, %arg7: memref<8x8x128xf32, #tpu.memory_space<vmem>>) attributes {dimension_semantics = [#tpu.dimension_semantics<parallel>, #tpu.dimension_semantics<arbitrary>], iteration_bounds = array<i64: 1, 1>, scalar_prefetch = 2 : i64, scratch_operands = 1 : i64, tpu.core_type = #tpu.core_type<tc>, window_params = [{transform_indices = @transform_0, window_bounds = array<i64: 112, 128>}, {transform_indices = @transform_1, window_bounds = array<i64: 8, 128>}, {transform_indices = @transform_2, window_bounds = array<i64: 1, 8, 128>}]} {
    %c1_i32 = arith.constant 1 : i32
    %0 = arith.muli %arg0, %c1_i32 : i32
    %1 = arith.addi %0, %arg1 : i32
    %c0_i32 = arith.constant 0 : i32
    %2 = arith.cmpi eq, %arg1, %c0_i32 : i32
    %3 = arith.extui %2 : i1 to i32
    %c0_i32_0 = arith.constant 0 : i32
    %4 = arith.cmpi ne, %3, %c0_i32_0 : i32
    scf.if %4 {
      %cst_54 = arith.constant 0.000000e+00 : f32
      %161 = vector.broadcast %cst_54 : f32 to vector<8x8x128xf32>
      %c0_55 = arith.constant 0 : index
      %c0_56 = arith.constant 0 : index
      %c0_57 = arith.constant 0 : index
      %162 = vector.load %arg7[%c0_55, %c0_56, %c0_57] : memref<8x8x128xf32, #tpu.memory_space<vmem>>, vector<8x8x128xf32>
      tpu.vector_store %arg7[%c0_55, %c0_56, %c0_57], %161 {strides = array<i32>} : memref<8x8x128xf32, #tpu.memory_space<vmem>>, vector<8x8x128xf32>,
    } else {
    }
    %c0 = arith.constant 0 : index
    %c0_1 = arith.constant 0 : index
    %5 = vector.load %arg4[%c0, %c0_1] : memref<112x128xf32, #tpu.memory_space<vmem>>, vector<8x128xf32>
    %c8 = arith.constant 8 : index
    %c0_2 = arith.constant 0 : index
    %6 = vector.load %arg4[%c8, %c0_2] : memref<112x128xf32, #tpu.memory_space<vmem>>, vector<8x128xf32>
    %c16 = arith.constant 16 : index
    %c0_3 = arith.constant 0 : index
    %7 = vector.load %arg4[%c16, %c0_3] : memref<112x128xf32, #tpu.memory_space<vmem>>, vector<8x128xf32>
    %c24 = arith.constant 24 : index
    %c0_4 = arith.constant 0 : index
    %8 = vector.load %arg4[%c24, %c0_4] : memref<112x128xf32, #tpu.memory_space<vmem>>, vector<8x128xf32>
    %c32 = arith.constant 32 : index
    %c0_5 = arith.constant 0 : index
    %9 = vector.load %arg4[%c32, %c0_5] : memref<112x128xf32, #tpu.memory_space<vmem>>, vector<8x128xf32>
    %c40 = arith.constant 40 : index
    %c0_6 = arith.constant 0 : index
    %10 = vector.load %arg4[%c40, %c0_6] : memref<112x128xf32, #tpu.memory_space<vmem>>, vector<8x128xf32>
    %c48 = arith.constant 48 : index
    %c0_7 = arith.constant 0 : index
    %11 = vector.load %arg4[%c48, %c0_7] : memref<112x128xf32, #tpu.memory_space<vmem>>, vector<8x128xf32>
    %c56 = arith.constant 56 : index
    %c0_8 = arith.constant 0 : index
    %12 = vector.load %arg4[%c56, %c0_8] : memref<112x128xf32, #tpu.memory_space<vmem>>, vector<8x128xf32>
    %c64 = arith.constant 64 : index
    %c0_9 = arith.constant 0 : index
    %13 = vector.load %arg4[%c64, %c0_9] : memref<112x128xf32, #tpu.memory_space<vmem>>, vector<8x128xf32>
    %c72 = arith.constant 72 : index
    %c0_10 = arith.constant 0 : index
    %14 = vector.load %arg4[%c72, %c0_10] : memref<112x128xf32, #tpu.memory_space<vmem>>, vector<8x128xf32>
    %c80 = arith.constant 80 : index
    %c0_11 = arith.constant 0 : index
    %15 = vector.load %arg4[%c80, %c0_11] : memref<112x128xf32, #tpu.memory_space<vmem>>, vector<8x128xf32>
    %c88 = arith.constant 88 : index
    %c0_12 = arith.constant 0 : index
    %16 = vector.load %arg4[%c88, %c0_12] : memref<112x128xf32, #tpu.memory_space<vmem>>, vector<8x128xf32>
    %c96 = arith.constant 96 : index
    %c0_13 = arith.constant 0 : index
    %17 = vector.load %arg4[%c96, %c0_13] : memref<112x128xf32, #tpu.memory_space<vmem>>, vector<8x128xf32>
    %c104 = arith.constant 104 : index
    %c0_14 = arith.constant 0 : index
    %18 = vector.load %arg4[%c104, %c0_14] : memref<112x128xf32, #tpu.memory_space<vmem>>, vector<8x128xf32>
    %19 = arith.subf %6, %5 : vector<8x128xf32>
    %20 = arith.subf %10, %9 : vector<8x128xf32>
    %21 = arith.subf %14, %13 : vector<8x128xf32>
    %22 = arith.subf %7, %6 : vector<8x128xf32>
    %23 = arith.subf %11, %10 : vector<8x128xf32>
    %24 = arith.subf %15, %14 : vector<8x128xf32>
    %25 = arith.subf %8, %7 : vector<8x128xf32>
    %26 = arith.subf %12, %11 : vector<8x128xf32>
    %27 = arith.subf %16, %15 : vector<8x128xf32>
    %28 = arith.mulf %20, %24 : vector<8x128xf32>
    %29 = arith.mulf %21, %23 : vector<8x128xf32>
    %30 = arith.subf %28, %29 : vector<8x128xf32>
    %31 = arith.mulf %21, %22 : vector<8x128xf32>
    %32 = arith.mulf %19, %24 : vector<8x128xf32>
    %33 = arith.subf %31, %32 : vector<8x128xf32>
    %34 = arith.mulf %19, %23 : vector<8x128xf32>
    %35 = arith.mulf %20, %22 : vector<8x128xf32>
    %36 = arith.subf %34, %35 : vector<8x128xf32>
    %37 = arith.mulf %23, %27 : vector<8x128xf32>
    %38 = arith.mulf %24, %26 : vector<8x128xf32>
    %39 = arith.subf %37, %38 : vector<8x128xf32>
    %40 = arith.mulf %24, %25 : vector<8x128xf32>
    %41 = arith.mulf %22, %27 : vector<8x128xf32>
    %42 = arith.subf %40, %41 : vector<8x128xf32>
    %43 = arith.mulf %22, %26 : vector<8x128xf32>
    %44 = arith.mulf %23, %25 : vector<8x128xf32>
    %45 = arith.subf %43, %44 : vector<8x128xf32>
    %46 = arith.mulf %22, %22 : vector<8x128xf32>
    %47 = arith.mulf %23, %23 : vector<8x128xf32>
    %48 = arith.addf %46, %47 : vector<8x128xf32>
    %49 = arith.mulf %24, %24 : vector<8x128xf32>
    %50 = arith.addf %48, %49 : vector<8x128xf32>
    %51 = math.sqrt %50 : vector<8x128xf32>
    %52 = arith.mulf %19, %39 : vector<8x128xf32>
    %53 = arith.mulf %20, %42 : vector<8x128xf32>
    %54 = arith.addf %52, %53 : vector<8x128xf32>
    %55 = arith.mulf %21, %45 : vector<8x128xf32>
    %56 = arith.addf %54, %55 : vector<8x128xf32>
    %57 = arith.mulf %51, %56 : vector<8x128xf32>
    %58 = arith.mulf %30, %39 : vector<8x128xf32>
    %59 = arith.mulf %33, %42 : vector<8x128xf32>
    %60 = arith.addf %58, %59 : vector<8x128xf32>
    %61 = arith.mulf %36, %45 : vector<8x128xf32>
    %62 = arith.addf %60, %61 : vector<8x128xf32>
    %cst = arith.constant 0.000000e+00 : f32
    %63 = vector.broadcast %cst : f32 to vector<8x128xf32>
    %64 = arith.subf %63, %62 : vector<8x128xf32>
    %cst_15 = arith.constant 0.000000e+00 : f32
    %65 = vector.broadcast %cst_15 : f32 to vector<8x128xf32>
    %66 = arith.cmpf oeq, %64, %65 : vector<8x128xf32>
    %cst_16 = arith.constant 1.000000e+00 : f32
    %67 = vector.broadcast %cst_16 : f32 to vector<8x128xf32>
    %68 = arith.select %66, %67, %64 : vector<8x128xi1>, vector<8x128xf32>
    %69 = tpu.reciprocal %68 {approx = true} : vector<8x128xf32> -> vector<8x128xf32>
    %70 = arith.mulf %68, %69 : vector<8x128xf32>
    %cst_17 = arith.constant 2.000000e+00 : f32
    %71 = vector.broadcast %cst_17 : f32 to vector<8x128xf32>
    %72 = arith.subf %71, %70 : vector<8x128xf32>
    %73 = arith.mulf %69, %72 : vector<8x128xf32>
    %74 = arith.mulf %57, %73 : vector<8x128xf32>
    %cst_18 = arith.constant 0.000000e+00 : f32
    %75 = vector.broadcast %cst_18 : f32 to vector<8x128xf32>
    %76 = arith.cmpf olt, %74, %75 : vector<8x128xf32>
    %cst_19 = arith.constant -1.000000e+00 : f32
    %cst_20 = arith.constant 1.000000e+00 : f32
    %77 = vector.broadcast %cst_19 : f32 to vector<8x128xf32>
    %78 = vector.broadcast %cst_20 : f32 to vector<8x128xf32>
    %79 = arith.select %76, %77, %78 : vector<8x128xi1>, vector<8x128xf32>
    %80 = math.absf %74 : vector<8x128xf32>
    %cst_21 = arith.constant 2.41421366 : f32
    %81 = vector.broadcast %cst_21 : f32 to vector<8x128xf32>
    %82 = arith.cmpf ogt, %80, %81 : vector<8x128xf32>
    %cst_22 = arith.constant 0.414213568 : f32
    %83 = vector.broadcast %cst_22 : f32 to vector<8x128xf32>
    %84 = arith.cmpf ogt, %80, %83 : vector<8x128xf32>
    %cst_23 = arith.constant dense<true> : vector<8x128xi1>
    %85 = arith.xori %82, %cst_23 : vector<8x128xi1>
    %86 = arith.andi %84, %85 : vector<8x128xi1>
    %cst_24 = arith.constant 1.000000e+00 : f32
    %87 = vector.broadcast %cst_24 : f32 to vector<8x128xf32>
    %88 = arith.subf %80, %87 : vector<8x128xf32>
    %89 = arith.select %86, %88, %80 : vector<8x128xi1>, vector<8x128xf32>
    %cst_25 = arith.constant -1.000000e+00 : f32
    %90 = vector.broadcast %cst_25 : f32 to vector<8x128xf32>
    %91 = arith.select %82, %90, %89 : vector<8x128xi1>, vector<8x128xf32>
    %cst_26 = arith.constant 1.000000e+00 : f32
    %92 = vector.broadcast %cst_26 : f32 to vector<8x128xf32>
    %93 = arith.addf %80, %92 : vector<8x128xf32>
    %cst_27 = arith.constant 1.000000e+00 : f32
    %94 = vector.broadcast %cst_27 : f32 to vector<8x128xf32>
    %95 = arith.select %86, %93, %94 : vector<8x128xi1>, vector<8x128xf32>
    %96 = arith.select %82, %80, %95 : vector<8x128xi1>, vector<8x128xf32>
    %97 = tpu.reciprocal %96 {approx = true} : vector<8x128xf32> -> vector<8x128xf32>
    %98 = arith.mulf %96, %97 : vector<8x128xf32>
    %cst_28 = arith.constant 2.000000e+00 : f32
    %99 = vector.broadcast %cst_28 : f32 to vector<8x128xf32>
    %100 = arith.subf %99, %98 : vector<8x128xf32>
    %101 = arith.mulf %97, %100 : vector<8x128xf32>
    %102 = arith.mulf %91, %101 : vector<8x128xf32>
    %cst_29 = arith.constant 0.785398185 : f32
    %cst_30 = arith.constant 0.000000e+00 : f32
    %103 = vector.broadcast %cst_29 : f32 to vector<8x128xf32>
    %104 = vector.broadcast %cst_30 : f32 to vector<8x128xf32>
    %105 = arith.select %86, %103, %104 : vector<8x128xi1>, vector<8x128xf32>
    %cst_31 = arith.constant 1.57079637 : f32
    %106 = vector.broadcast %cst_31 : f32 to vector<8x128xf32>
    %107 = arith.select %82, %106, %105 : vector<8x128xi1>, vector<8x128xf32>
    %108 = arith.mulf %102, %102 : vector<8x128xf32>
    %cst_32 = arith.constant 0.0805374458 : f32
    %109 = vector.broadcast %cst_32 : f32 to vector<8x128xf32>
    %110 = arith.mulf %109, %108 : vector<8x128xf32>
    %cst_33 = arith.constant 0.138776854 : f32
    %111 = vector.broadcast %cst_33 : f32 to vector<8x128xf32>
    %112 = arith.subf %110, %111 : vector<8x128xf32>
    %113 = arith.mulf %112, %108 : vector<8x128xf32>
    %cst_34 = arith.constant 0.199777111 : f32
    %114 = vector.broadcast %cst_34 : f32 to vector<8x128xf32>
    %115 = arith.addf %113, %114 : vector<8x128xf32>
    %116 = arith.mulf %115, %108 : vector<8x128xf32>
    %cst_35 = arith.constant 0.333329499 : f32
    %117 = vector.broadcast %cst_35 : f32 to vector<8x128xf32>
    %118 = arith.subf %116, %117 : vector<8x128xf32>
    %119 = arith.mulf %118, %108 : vector<8x128xf32>
    %120 = arith.mulf %119, %102 : vector<8x128xf32>
    %121 = arith.addf %120, %102 : vector<8x128xf32>
    %122 = arith.addf %107, %121 : vector<8x128xf32>
    %123 = arith.mulf %79, %122 : vector<8x128xf32>
    %cst_36 = arith.constant 0.000000e+00 : f32
    %124 = vector.broadcast %cst_36 : f32 to vector<8x128xf32>
    %125 = arith.cmpf oge, %57, %124 : vector<8x128xf32>
    %cst_37 = arith.constant 3.14159274 : f32
    %126 = vector.broadcast %cst_37 : f32 to vector<8x128xf32>
    %127 = arith.addf %123, %126 : vector<8x128xf32>
    %cst_38 = arith.constant 3.14159274 : f32
    %128 = vector.broadcast %cst_38 : f32 to vector<8x128xf32>
    %129 = arith.subf %123, %128 : vector<8x128xf32>
    %130 = arith.select %125, %127, %129 : vector<8x128xi1>, vector<8x128xf32>
    %cst_39 = arith.constant 0.000000e+00 : f32
    %131 = vector.broadcast %cst_39 : f32 to vector<8x128xf32>
    %132 = arith.cmpf ogt, %57, %131 : vector<8x128xf32>
    %cst_40 = arith.constant 0.000000e+00 : f32
    %133 = vector.broadcast %cst_40 : f32 to vector<8x128xf32>
    %134 = arith.cmpf olt, %57, %133 : vector<8x128xf32>
    %cst_41 = arith.constant 0.000000e+00 : f32
    %cst_42 = arith.constant 1.57079637 : f32
    %135 = arith.subf %cst_41, %cst_42 : f32
    %cst_43 = arith.constant 0.000000e+00 : f32
    %136 = vector.broadcast %135 : f32 to vector<8x128xf32>
    %137 = vector.broadcast %cst_43 : f32 to vector<8x128xf32>
    %138 = arith.select %134, %136, %137 : vector<8x128xi1>, vector<8x128xf32>
    %cst_44 = arith.constant 1.57079637 : f32
    %139 = vector.broadcast %cst_44 : f32 to vector<8x128xf32>
    %140 = arith.select %132, %139, %138 : vector<8x128xi1>, vector<8x128xf32>
    %cst_45 = arith.constant 0.000000e+00 : f32
    %141 = vector.broadcast %cst_45 : f32 to vector<8x128xf32>
    %142 = arith.cmpf ogt, %64, %141 : vector<8x128xf32>
    %cst_46 = arith.constant 0.000000e+00 : f32
    %143 = vector.broadcast %cst_46 : f32 to vector<8x128xf32>
    %144 = arith.cmpf olt, %64, %143 : vector<8x128xf32>
    %145 = arith.select %144, %130, %140 : vector<8x128xi1>, vector<8x128xf32>
    %146 = arith.select %142, %123, %145 : vector<8x128xi1>, vector<8x128xf32>
    %147 = arith.subf %146, %17 : vector<8x128xf32>
    %148 = arith.mulf %18, %147 : vector<8x128xf32>
    %149 = arith.mulf %148, %147 : vector<8x128xf32>
    %c0_47 = arith.constant 0 : index
    %c0_48 = arith.constant 0 : index
    %150 = vector.load %arg5[%c0_47, %c0_48] : memref<8x128xi32, #tpu.memory_space<vmem>>, vector<8x128xi32>
    %151 = arith.index_cast %1 : i32 to index
    %152 = memref.load %arg2[%151] : memref<1xi32, #tpu.memory_space<smem>>
    %153 = arith.index_cast %1 : i32 to index
    %154 = memref.load %arg3[%153] : memref<1xi32, #tpu.memory_space<smem>>
    %c1_i32_49 = arith.constant 1 : i32
    %155 = arith.addi %154, %c1_i32_49 : i32
    %c0_i32_50 = arith.constant 0 : i32
    %156 = arith.subi %155, %152 : i32
    %157 = arith.addi %152, %156 : i32
    %c1_i32_51 = arith.constant 1 : i32
    scf.for %arg8 = %152 to %157 step %c1_i32_51  : i32 {
      %161 = vector.broadcast %arg8 : i32 to vector<8x128xi32>
      %162 = arith.cmpi eq, %150, %161 : vector<8x128xi32>
      %cst_54 = arith.constant 0.000000e+00 : f32
      %163 = vector.broadcast %cst_54 : f32 to vector<8x128xf32>
      %164 = arith.select %162, %149, %163 : vector<8x128xi1>, vector<8x128xf32>
      %165 = arith.index_cast %arg8 : i32 to index
      %c0_55 = arith.constant 0 : index
      %c0_56 = arith.constant 0 : index
      %166 = vector.load %arg7[%165, %c0_55, %c0_56] : memref<8x8x128xf32, #tpu.memory_space<vmem>>, vector<1x8x128xf32>
      %167 = vector.shape_cast %166 : vector<1x8x128xf32> to vector<8x128xf32>
      %168 = arith.addf %167, %164 : vector<8x128xf32>
      %169 = arith.index_cast %arg8 : i32 to index
      %c0_57 = arith.constant 0 : index
      %c0_58 = arith.constant 0 : index
      %170 = vector.load %arg7[%169, %c0_57, %c0_58] : memref<8x8x128xf32, #tpu.memory_space<vmem>>, vector<1x8x128xf32>
      %171 = vector.shape_cast %170 : vector<1x8x128xf32> to vector<8x128xf32>
      %172 = vector.shape_cast %168 : vector<8x128xf32> to vector<1x8x128xf32>
      tpu.vector_store %arg7[%169, %c0_57, %c0_58], %172 {strides = array<i32>} : memref<8x8x128xf32, #tpu.memory_space<vmem>>, vector<1x8x128xf32>,
    }
    %c0_i32_52 = arith.constant 0 : i32
    %158 = arith.cmpi eq, %arg1, %c0_i32_52 : i32
    %159 = arith.extui %158 : i1 to i32
    %c0_i32_53 = arith.constant 0 : i32
    %160 = arith.cmpi ne, %159, %c0_i32_53 : i32
    scf.if %160 {
      %c0_54 = arith.constant 0 : index
      %c0_55 = arith.constant 0 : index
      %c0_56 = arith.constant 0 : index
      %161 = vector.load %arg7[%c0_54, %c0_55, %c0_56] : memref<8x8x128xf32, #tpu.memory_space<vmem>>, vector<8x8x128xf32>
      %cst_57 = arith.constant dense<0.000000e+00> : vector<8x128xf32>
      %162 = vector.multi_reduction <add>, %161, %cst_57 [1] : vector<8x8x128xf32> to vector<8x128xf32>
      %c0_58 = arith.constant 0 : index
      %c0_59 = arith.constant 0 : index
      %c0_60 = arith.constant 0 : index
      %163 = vector.load %arg6[%c0_58, %c0_59, %c0_60] : memref<1x8x128xf32, #tpu.memory_space<vmem>>, vector<1x8x128xf32>
      %164 = vector.shape_cast %163 : vector<1x8x128xf32> to vector<8x128xf32>
      %165 = vector.shape_cast %162 : vector<8x128xf32> to vector<1x8x128xf32>
      tpu.vector_store %arg6[%c0_58, %c0_59, %c0_60], %165 {strides = array<i32>} : memref<1x8x128xf32, #tpu.memory_space<vmem>>, vector<1x8x128xf32>,
    } else {
    }
    return
  }
  func.func @transform_0(%arg0: i32, %arg1: i32, %arg2: memref<1xi32, #tpu.memory_space<smem>>, %arg3: memref<1xi32, #tpu.memory_space<smem>>) -> (i32, i32) {
    %c1_i32 = arith.constant 1 : i32
    %0 = arith.muli %arg0, %c1_i32 : i32
    %1 = arith.addi %0, %arg1 : i32
    %c0_i32 = arith.constant 0 : i32
    %c0_i32_0 = arith.constant 0 : i32
    return %c0_i32, %1 : i32, i32
  }
  func.func @transform_1(%arg0: i32, %arg1: i32, %arg2: memref<1xi32, #tpu.memory_space<smem>>, %arg3: memref<1xi32, #tpu.memory_space<smem>>) -> (i32, i32) {
    %c1_i32 = arith.constant 1 : i32
    %0 = arith.muli %arg0, %c1_i32 : i32
    %1 = arith.addi %0, %arg1 : i32
    %c0_i32 = arith.constant 0 : i32
    %c0_i32_0 = arith.constant 0 : i32
    return %c0_i32, %1 : i32, i32
  }
  func.func @transform_2(%arg0: i32, %arg1: i32, %arg2: memref<1xi32, #tpu.memory_space<smem>>, %arg3: memref<1xi32, #tpu.memory_space<smem>>) -> (i32, i32, i32) {
    %c0_i32 = arith.constant 0 : i32
    %c0_i32_0 = arith.constant 0 : i32
    %c0_i32_1 = arith.constant 0 : i32
    return %arg0, %c0_i32, %c0_i32_0 : i32, i32, i32
  }
}

</mosaic_0001>

<llo_original>
// kernel: tpu_custom_call.1
$region0: #{tpu_custom_call.1}
  #allocation0 [shape = 'u32[]', space=smem, size = 0x4, offset = 0x4, fixed_abs, tag = 'smem constant byte address 0x4 - core index']
  #allocation1 [shape = 'u32[144,128]{1,0:T(1,128)}', space=vmem, size = 0x12000, scoped, tag = 'internal scratch']
  #allocation2 [shape = 'f32[8,8,128]{2,1,0:T(8,128)}', space=vmem, size = 0x8000, scoped, tag = 'scratch operand']
  #allocation3 [shape = 's32[1]{0}', space=sflag, size = 0x4, scoped, tag = 'scoped memory for tpu_custom_call.1']
  #allocation4 [shape = 's32[1]{0:T(128)S(6)}', space=smem, size = 0x200, scoped, tag = 'prefetched SMEM operand 0']
  #allocation5 [shape = 's32[1]{0:T(128)S(6)}', space=smem, size = 0x200, scoped, tag = 'prefetched SMEM operand 1']
  %s0 = inlined_call_operand.<no memory space> [shape: s32[1], index: 0, kind: input, shape index: {}]
  %s1 = inlined_call_operand.<no memory space> [shape: s32[1], index: 1, kind: input, shape index: {}]
  %s2 = inlined_call_operand.hbm [shape: f32[112,128], index: 2, kind: input, shape index: {}]
  %s3 = inlined_call_operand.vmem [shape: s32[8,128], index: 3, kind: input, shape index: {}]
  %s4 = inlined_call_operand.hbm [shape: f32[1,8,128], index: 4, kind: output, shape index: {}]
  %s5 = sld [smem:[#allocation0]]
  $region37: #{tpu_custom_call.1} parent=0
    _
  %s7 = ssub.s32 1, %s5
  %s8 = scalar_select 0, %s7, %s5
  %9 = sst [smem:[#allocation4]] %s0
  %10 = sst [smem:[#allocation5]] %s1
  $region1: #{tpu_custom_call.1} parent=0
    #allocation6 [shape = 'u8[57344]{0}', space=vmem, size = 0xe000, scoped, tag = 'input window, operand 2, single buffered']
    #allocation7 [shape = 's32[1]{0}', space=sflag, size = 0x4, scoped, tag = 'scoped memory for tpu_custom_call.1']
    #allocation8 [shape = 's32[1]{0}', space=sflag, size = 0x4, scoped, tag = 'scoped memory for tpu_custom_call.1']
    #allocation9 [shape = 'u8[4096]{0}', space=vmem, size = 0x1000, scoped, tag = 'output window, operand 0, single buffered']
    %11 = vsyncpa [#allocation7], 0
    %12 = vsyncpa [#allocation8], 0
    // Predicated region
    $region2: #{tpu_custom_call.1} parent=1 // pred_check
      _
    $region3: #{tpu_custom_call.1} parent=1 // pred_check_branch
      %14 = sbr.rel (0) target = $region5
    $region4: #{tpu_custom_call.1} parent=1 // pred_region
      %s15 = sadd.s32 0, 0
      %s17 = ssub.s32 1792, 1792
      %18 = vsyncadd [#allocation7], %s17
      %s19 = smul.addr %s15, 128
      %s20 = scalar_lea.hbm %s2, %s19
      %s21 = sshll.u32 [#allocation6], 4
      %s22 = int_to_ptr.vmem [resolvable:$true] %s21
      %27 = dma.hbm_to_vmem [thread:$0]  %s20, 1792, %s22, [#allocation7], 128, 128, 8
    $region5: #{tpu_custom_call.1} parent=1 // pred_fallthru
      _
    // Predicated region
    $region6: #{tpu_custom_call.1} parent=1 // pred_check
      _
    $region7: #{tpu_custom_call.1} parent=1 // pred_check_branch
      %29 = sbr.rel (0) target = $region9
    $region8: #{tpu_custom_call.1} parent=1 // pred_region
      %s30 = sadd.s32 0, 0
      %p31 = scmp.lt.s32.totalorder %s30, 0
      %s32 = scalar_select %p31, %s30, 0
      %s33 = smul.addr %s32, 8
      %s34 = scalar_lea.vmem %s3, %s33
      %s35 = sadd.s32 0, 0
    $region9: #{tpu_custom_call.1} parent=1 // pred_fallthru
      _
    // Predicated region
    $region10: #{tpu_custom_call.1} parent=1 // pred_check
      _
    $region11: #{tpu_custom_call.1} parent=1 // pred_check_branch
      %37 = sbr.rel (0) target = $region13
    $region12: #{tpu_custom_call.1} parent=1 // pred_region
      %38 = dma.done [#allocation7], 1792
    $region13: #{tpu_custom_call.1} parent=1 // pred_fallthru
      _
    %s39 = sadd.s32 0, 0
    %p40 = scmp.lt.s32.totalorder %s39, 0
    %s41 = scalar_select %p40, %s39, 0
    %s42 = smul.addr %s41, 8
    %s43 = scalar_lea.vmem %s3, %s42
    %s44 = sadd.s32 0, 0
    %s45 = sadd.s32 0, 0
    %p46 = scmp.lt.s32.totalorder %s45, 0
    %s47 = scalar_select %p46, %s45, 0
    %s48 = smul.addr %s47, 8
    %s49 = scalar_lea.vmem %s3, %s48
    %s50 = sadd.s32 0, 0
    %s51 = sadd.s32 0, 0
    %p52 = scmp.eq.s32.totalorder 0, 0
    // Predicated region
    $region14: #{tpu_custom_call.1} parent=1 // pred_check
      %p53 = pneg %p52
    $region15: #{tpu_custom_call.1} parent=1 // pred_check_branch
      %55 = sbr.rel (%p53) target = $region17
    $region16: #{tpu_custom_call.1} parent=1 // pred_region
      %56 = vst [vmem:[#allocation2] sm:$0xff] 0.0
      %57 = vst [vmem:[#allocation2 + $0x8] sm:$0xff] 0.0
      %58 = vst [vmem:[#allocation2 + $0x10] sm:$0xff] 0.0
      %59 = vst [vmem:[#allocation2 + $0x18] sm:$0xff] 0.0
      %60 = vst [vmem:[#allocation2 + $0x20] sm:$0xff] 0.0
      %61 = vst [vmem:[#allocation2 + $0x28] sm:$0xff] 0.0
      %62 = vst [vmem:[#allocation2 + $0x30] sm:$0xff] 0.0
      %63 = vst [vmem:[#allocation2 + $0x38] sm:$0xff] 0.0
    $region17: #{tpu_custom_call.1} parent=1 // pred_fallthru
      _
    %v64 = vld [vmem:[#allocation6] sm:$0xff]
    %v65 = vld [vmem:[#allocation6 + $0x8] sm:$0xff]
    %v66 = vld [vmem:[#allocation6 + $0x10] sm:$0xff]
    %v67 = vld [vmem:[#allocation6 + $0x18] sm:$0xff]
    %v68 = vld [vmem:[#allocation6 + $0x20] sm:$0xff]
    %v69 = vld [vmem:[#allocation6 + $0x28] sm:$0xff]
    %v70 = vld [vmem:[#allocation6 + $0x30] sm:$0xff]
    %v71 = vld [vmem:[#allocation6 + $0x38] sm:$0xff]
    %v72 = vld [vmem:[#allocation6 + $0x40] sm:$0xff]
    %v73 = vld [vmem:[#allocation6 + $0x48] sm:$0xff]
    %v74 = vld [vmem:[#allocation6 + $0x50] sm:$0xff]
    %v75 = vld [vmem:[#allocation6 + $0x58] sm:$0xff]
    %v76 = vld [vmem:[#allocation6 + $0x60] sm:$0xff]
    %v77 = vld [vmem:[#allocation6 + $0x68] sm:$0xff]
    %v78 = vsub.f32 %v65, %v64
    %v79 = vsub.f32 %v69, %v68
    %v80 = vsub.f32 %v73, %v72
    %v81 = vsub.f32 %v66, %v65
    %v82 = vsub.f32 %v70, %v69
    %v83 = vsub.f32 %v74, %v73
    %v84 = vsub.f32 %v67, %v66
    %v85 = vsub.f32 %v71, %v70
    %v86 = vsub.f32 %v75, %v74
    %v87 = vmul.f32 %v79, %v83
    %v88 = vmul.f32 %v80, %v82
    %v89 = vsub.f32 %v87, %v88
    %v90 = vmul.f32 %v80, %v81
    %v91 = vmul.f32 %v78, %v83
    %v92 = vsub.f32 %v90, %v91
    %v93 = vmul.f32 %v78, %v82
    %v94 = vmul.f32 %v79, %v81
    %v95 = vsub.f32 %v93, %v94
    %v96 = vmul.f32 %v82, %v86
    %v97 = vmul.f32 %v83, %v85
    %v98 = vsub.f32 %v96, %v97
    %v99 = vmul.f32 %v83, %v84
    %v100 = vmul.f32 %v81, %v86
    %v101 = vsub.f32 %v99, %v100
    %v102 = vmul.f32 %v81, %v85
    %v103 = vmul.f32 %v82, %v84
    %v104 = vsub.f32 %v102, %v103
    %v105 = vmul.f32 %v81, %v81
    %v106 = vmul.f32 %v82, %v82
    %v107 = vadd.f32 %v105, %v106
    %v108 = vmul.f32 %v83, %v83
    %v109 = vadd.f32 %v107, %v108
    %v110 = vrsqrt.pop %v109
    %v111 = vmul.f32 %v109, %v110
    %vm112 = vcmp.eq.f32.partialorder %v109, inf
    %v113 = vsel %vm112, %v109, %v111
    %vm114 = vcmp.eq.f32.partialorder %v109, 0.0
    %v115 = vand.u32 %v109, 2147483648
    %v116 = vsel %vm114, %v115, %v113
    %v117 = vmul.f32 %v78, %v98
    %v118 = vmul.f32 %v79, %v101
    %v119 = vadd.f32 %v117, %v118
    %v120 = vmul.f32 %v80, %v104
    %v121 = vadd.f32 %v119, %v120
    %v122 = vmul.f32 %v116, %v121
    %v123 = vmul.f32 %v89, %v98
    %v124 = vmul.f32 %v92, %v101
    %v125 = vadd.f32 %v123, %v124
    %v126 = vmul.f32 %v95, %v104
    %v127 = vadd.f32 %v125, %v126
    %v128 = vsub.f32 0.0, %v127
    %vm129 = vcmp.eq.f32.partialorder %v128, 0.0
    %v130 = vsel %vm129, 1.0, %v128
    %v131 = vrcp.pop %v130
    %v132 = vmul.f32 %v130, %v131
    %v133 = vsub.f32 2.0, %v132
    %v134 = vmul.f32 %v131, %v133
    %v135 = vmul.f32 %v122, %v134
    %vm136 = vcmp.lt.f32.partialorder %v135, 0.0
    %v137 = vsel %vm136, -1.0, 1.0
    %v138 = vand.u32 2147483647, %v135
    %vm139 = vcmp.gt.f32.partialorder %v138, 2.4142137
    %vm140 = vcmp.gt.f32.partialorder %v138, 0.41421357
    %vm141 = vmxor %vm139, 1
    %vm142 = vmand %vm140, %vm141
    %v143 = vsub.f32 %v138, 1.0
    %v144 = vsel %vm142, %v143, %v138
    %v145 = vsel %vm139, -1.0, %v144
    %v146 = vadd.f32 %v138, 1.0
    %v147 = vsel %vm142, %v146, 1.0
    %v148 = vsel %vm139, %v138, %v147
    %v149 = vrcp.pop %v148
    %v150 = vmul.f32 %v148, %v149
    %v151 = vsub.f32 2.0, %v150
    %v152 = vmul.f32 %v149, %v151
    %v153 = vmul.f32 %v145, %v152
    %v154 = vsel %vm142, 0.7853982, 0.0
    %v155 = vsel %vm139, 1.5707964, %v154
    %v156 = vmul.f32 %v153, %v153
    %v157 = vmul.f32 %v156, 0.080537446
    %v158 = vsub.f32 %v157, 0.13877685
    %v159 = vmul.f32 %v158, %v156
    %v160 = vadd.f32 %v159, 0.19977711
    %v161 = vmul.f32 %v160, %v156
    %v162 = vsub.f32 %v161, 0.3333295
    %v163 = vmul.f32 %v162, %v156
    %v164 = vmul.f32 %v163, %v153
    %v165 = vadd.f32 %v164, %v153
    %v166 = vadd.f32 %v155, %v165
    %v167 = vmul.f32 %v137, %v166
    %vm168 = vcmp.ge.f32.partialorder %v122, 0.0
    %v169 = vadd.f32 %v167, 3.1415927
    %v170 = vsub.f32 %v167, 3.1415927
    %v171 = vsel %vm168, %v169, %v170
    %vm172 = vcmp.gt.f32.partialorder %v122, 0.0
    %vm173 = vcmp.lt.f32.partialorder %v122, 0.0
    %v174 = vsel %vm173, -1.5707964, 0.0
    %v175 = vsel %vm172, 1.5707964, %v174
    %vm176 = vcmp.gt.f32.partialorder %v128, 0.0
    %vm177 = vcmp.lt.f32.partialorder %v128, 0.0
    %v178 = vsel %vm177, %v171, %v175
    %v179 = vsel %vm176, %v167, %v178
    %v180 = vsub.f32 %v179, %v76
    %v181 = vmul.f32 %v77, %v180
    %v182 = vmul.f32 %v181, %v180
    %v183 = vld [vmem:[%s49] sm:$0xff]
    %s184 = sld [smem:[#allocation4 + %s51]]
    %s185 = sld [smem:[#allocation5 + %s51]]
    %s186 = sadd.s32 %s185, 1
    // While loop
    $region18: #{tpu_custom_call.1} parent=1 // loop_pre_header
      _
    $region19: #{tpu_custom_call.1} parent=1 // loop_header
      %s188 = sphi %s184, %s190
      %p189 = scmp.ge.s32.totalorder %s188, %s186
    $region20: #{tpu_custom_call.1} parent=1 // loop_header_branch
      %192 = sbr.rel (%p189) target = $region24
    $region21: #{tpu_custom_call.1} parent=1 // loop_body
      %v193 = vstv %s188
      %vm194 = vcmp.eq.s32.totalorder %v183, %v193
      %v195 = vsel %vm194, %v182, 0.0
      %s196 = smul.u32 %s188, 8
      %s197 = scalar_lea.vmem [#allocation2], %s196
      %v198 = vld [vmem:[%s197] sm:$0xff]
      %v199 = vadd.f32 %v198, %v195
      %200 = vst [vmem:[%s197] sm:$0xff] %v199
    $region22: #{tpu_custom_call.1} parent=1 // loop_footer
      %s190 = sadd.s32 %s188, 1
    $region23: #{tpu_custom_call.1} parent=1 // loop_footer_branch
      %187 = sbr.rel target = $region19
    $region24: #{tpu_custom_call.1} parent=1 // loop_exit
      _
    // Predicated region
    $region25: #{tpu_custom_call.1} parent=1 // pred_check
      %p201 = pneg %p52
    $region26: #{tpu_custom_call.1} parent=1 // pred_check_branch
      %203 = sbr.rel (%p201) target = $region28
    $region27: #{tpu_custom_call.1} parent=1 // pred_region
      %v204 = vld [vmem:[#allocation2] sm:$0xff]
      %v205 = vld [vmem:[#allocation2 + $0x8] sm:$0xff]
      %v206 = vld [vmem:[#allocation2 + $0x10] sm:$0xff]
      %v207 = vld [vmem:[#allocation2 + $0x18] sm:$0xff]
      %v208 = vld [vmem:[#allocation2 + $0x20] sm:$0xff]
      %v209 = vld [vmem:[#allocation2 + $0x28] sm:$0xff]
      %v210 = vld [vmem:[#allocation2 + $0x30] sm:$0xff]
      %v211 = vld [vmem:[#allocation2 + $0x38] sm:$0xff]
      %v212 = vrot.slane %v204, 4
      %v213 = vadd.f32 %v204, %v212
      %v214 = vrot.slane %v213, 2
      %v215 = vadd.f32 %v213, %v214
      %v216 = vrot.slane %v215, 1
      %v217 = vadd.f32 %v215, %v216
      %v218 = vrot.slane %v205, 4
      %v219 = vadd.f32 %v205, %v218
      %v220 = vrot.slane %v219, 2
      %v221 = vadd.f32 %v219, %v220
      %v222 = vrot.slane %v221, 1
      %v223 = vadd.f32 %v221, %v222
      %v224 = vrot.slane %v206, 4
      %v225 = vadd.f32 %v206, %v224
      %v226 = vrot.slane %v225, 2
      %v227 = vadd.f32 %v225, %v226
      %v228 = vrot.slane %v227, 1
      %v229 = vadd.f32 %v227, %v228
      %v230 = vrot.slane %v207, 4
      %v231 = vadd.f32 %v207, %v230
      %v232 = vrot.slane %v231, 2
      %v233 = vadd.f32 %v231, %v232
      %v234 = vrot.slane %v233, 1
      %v235 = vadd.f32 %v233, %v234
      %v236 = vrot.slane %v208, 4
      %v237 = vadd.f32 %v208, %v236
      %v238 = vrot.slane %v237, 2
      %v239 = vadd.f32 %v237, %v238
      %v240 = vrot.slane %v239, 1
      %v241 = vadd.f32 %v239, %v240
      %v242 = vrot.slane %v209, 4
      %v243 = vadd.f32 %v209, %v242
      %v244 = vrot.slane %v243, 2
      %v245 = vadd.f32 %v243, %v244
      %v246 = vrot.slane %v245, 1
      %v247 = vadd.f32 %v245, %v246
      %v248 = vrot.slane %v210, 4
      %v249 = vadd.f32 %v210, %v248
      %v250 = vrot.slane %v249, 2
      %v251 = vadd.f32 %v249, %v250
      %v252 = vrot.slane %v251, 1
      %v253 = vadd.f32 %v251, %v252
      %v254 = vrot.slane %v211, 4
      %v255 = vadd.f32 %v211, %v254
      %v256 = vrot.slane %v255, 2
      %v257 = vadd.f32 %v255, %v256
      %v258 = vrot.slane %v257, 1
      %v259 = vadd.f32 %v257, %v258
      %vm268 = vcmask 1041409
      %v269 = vsel %vm268, %v223, %v217
      %vm270 = vcmask 1042434
      %v271 = vsel %vm270, %v229, %v269
      %vm272 = vcmask 1043459
      %v273 = vsel %vm272, %v235, %v271
      %vm274 = vcmask 1044484
      %v275 = vsel %vm274, %v241, %v273
      %vm276 = vcmask 1045509
      %v277 = vsel %vm276, %v247, %v275
      %vm278 = vcmask 1046534
      %v279 = vsel %vm278, %v253, %v277
      %vm280 = vcmask 1047559
      %v281 = vsel %vm280, %v259, %v279
      %283 = vst [vmem:[#allocation9] sm:$0xff] %v281
    $region28: #{tpu_custom_call.1} parent=1 // pred_fallthru
      _
    // Predicated region
    $region29: #{tpu_custom_call.1} parent=1 // pred_check
      _
    $region30: #{tpu_custom_call.1} parent=1 // pred_check_branch
      %285 = sbr.rel (0) target = $region32
    $region31: #{tpu_custom_call.1} parent=1 // pred_region
      %s287 = ssub.s32 128, 128
      %288 = vsyncadd [#allocation8], %s287
      %s290 = sshll.u32 [#allocation9], 4
      %s291 = int_to_ptr.vmem [resolvable:$true] %s290
      %293 = dma.vmem_to_hbm [thread:$0]  %s291, 128, %s4, [#allocation8]
    $region32: #{tpu_custom_call.1} parent=1 // pred_fallthru
      _
    // Predicated region
    $region33: #{tpu_custom_call.1} parent=1 // pred_check
      _
    $region34: #{tpu_custom_call.1} parent=1 // pred_check_branch
      %295 = sbr.rel (0) target = $region36
    $region35: #{tpu_custom_call.1} parent=1 // pred_region
      %296 = dma.done [#allocation8], 128
    $region36: #{tpu_custom_call.1} parent=1 // pred_fallthru
      _
    %297 = vsyncpa [#allocation7], 1
    %298 = vsyncpa [#allocation8], 1

</llo_original>
